<compile_context>
chip_gen: v7x
topology: tpu7x:2x2x1
jax: 0.10.0
libtpu: 0.0.40
codegen_flags: <defaults>
</compile_context>

<pallas_src>
import functools

import jax
import jax.numpy as jnp
from jax import lax
from jax.experimental import pallas as pl
from jax.experimental.pallas import tpu as pltpu


def _round_up(x, m):
    return ((x + m - 1) // m) * m


def _pad2(a, rows, cols):
    if rows or cols:
        return jnp.pad(a, ((0, rows), (0, cols)))
    return a


def _pad_row(a, cols):
    # 1-D vector -> lane-dense (1, padded) row.
    if cols:
        a = jnp.pad(a, (0, cols))
    return a.reshape(1, -1)


def _tpu_flavor():
    """Best-effort TPU generation sniffing for tile defaults / VMEM budget."""
    try:
        kind = jax.devices()[0].device_kind.lower()
    except Exception:
        kind = ""
    is_v5e = ("v5 lite" in kind) or ("v5e" in kind) or ("v5litepod" in kind)
    is_v7 = "v7" in kind
    return is_v5e, is_v7


# --------------------------------------------------------------------------------------
# Kernels
# --------------------------------------------------------------------------------------

def _fused_kernel(x_ref, wmu_ref, wls_ref, weps_ref, bmu_ref, bls_ref, beps_ref,
                  o_ref, *scratch, compute_dtype):
    """Single-batch-tile path: sample W = mu + exp(log_sigma)*eps per (out,in) tile.

    With one batch tile the parameter tiles are streamed exactly once, so fusing the
    sampling here (3 x f32 reads) is cheaper than materializing W separately.
    Sampling stays in f32; only the MXU operands are cast to compute_dtype.
    """
    acc_ref = scratch[0] if scratch else o_ref        # accumulate into o_ref when f32
    k = pl.program_id(2)

    w = (wmu_ref[...].astype(jnp.float32)
         + jnp.exp(wls_ref[...].astype(jnp.float32)) * weps_ref[...].astype(jnp.float32))

    # F.linear: contract last axis of x (tm, tk) with last axis of w (tn, tk) -> (tm, tn),
    # no explicit transpose, f32 MXU accumulation.
    part = lax.dot_general(
        x_ref[...].astype(compute_dtype), w.astype(compute_dtype),
        dimension_numbers=(((1,), (1,)), ((), ())),
        preferred_element_type=jnp.float32)

    @pl.when(k == 0)
    def _first():
        acc_ref[...] = part.astype(acc_ref.dtype)

    @pl.when(k > 0)
    def _accum():
        acc_ref[...] += part.astype(acc_ref.dtype)

    @pl.when(k == pl.num_programs(2) - 1)
    def _finalize():
        b = (bmu_ref[...].astype(jnp.float32)
             + jnp.exp(bls_ref[...].astype(jnp.float32)) * beps_ref[...].astype(jnp.float32))
        o_ref[...] = (acc_ref[...].astype(jnp.float32) + b).astype(o_ref.dtype)


def _matmul_bias_kernel(x_ref, w_ref, b_ref, o_ref, *scratch):
    """Multi-batch-tile path: W/bias already sampled (f32) and cast in the wrapper."""
    acc_ref = scratch[0] if scratch else o_ref
    k = pl.program_id(2)

    part = lax.dot_general(
        x_ref[...], w_ref[...],
        dimension_numbers=(((1,), (1,)), ((), ())),
        preferred_element_type=jnp.float32)

    @pl.when(k == 0)
    def _first():
        acc_ref[...] = part.astype(acc_ref.dtype)

    @pl.when(k > 0)
    def _accum():
        acc_ref[...] += part.astype(acc_ref.dtype)

    @pl.when(k == pl.num_programs(2) - 1)
    def _finalize():
        o_ref[...] = (acc_ref[...].astype(jnp.float32) + b_ref[...]).astype(o_ref.dtype)


# --------------------------------------------------------------------------------------
# Wrapper
# --------------------------------------------------------------------------------------

def bayesian_linear(x, weight_mu, weight_log_sigma, bias_mu, bias_log_sigma,
                    weight_eps, bias_eps, *,
                    compute_dtype=jnp.bfloat16,
                    tm=None, tn=None, tk=None,
                    allow_xla_fallback=True):
    """y = x @ (weight_mu + exp(weight_log_sigma)*weight_eps).T
           + (bias_mu + exp(bias_log_sigma)*bias_eps)

    Tiled over (batch, out_features, in_features); in_features is the last ('arbitrary')
    grid axis with f32 accumulation into the resident output block.
    """
    # TODO(synk): torch.randn_like eps is drawn outside the kernel (passed as inputs);
    # in-kernel pltpu.prng_random_bits sampling would avoid streaming eps from HBM.
    batch, in_f = x.shape
    out_f = weight_mu.shape[0]
    out_dtype = x.dtype

    # ---- Small-problem fallback: XLA's fused exp+mul+add+matmul wins here. ----
    if allow_xla_fallback and (out_f < 128 or in_f < 128
                               or batch * out_f * in_f < (1 << 21)):
        w = weight_mu + jnp.exp(weight_log_sigma) * weight_eps
        b = bias_mu + jnp.exp(bias_log_sigma) * bias_eps
        return (x @ w.T + b).astype(out_dtype)

    is_v5e, is_v7 = _tpu_flavor()

    m_min = _round_up(batch, 8)
    n_min = _round_up(out_f, 128)
    k_min = _round_up(in_f, 128)

    x_bytes = jnp.dtype(x.dtype).itemsize
    out_bytes = jnp.dtype(out_dtype).itemsize
    cdt_bytes = jnp.dtype(compute_dtype).itemsize
    use_scratch = jnp.dtype(out_dtype) != jnp.dtype(jnp.float32)

    # ---- Tile selection: prioritize tm (weights stream once per batch tile). ----
    tn_pref = tn if tn is not None else (128 if is_v5e else 256)
    tn_e = min(_round_up(tn_pref, 128), n_min)
    if n_min % tn_e:                      # avoid N padding when 128 divides exactly
        tn_e = 128

    budget = (40 << 20) if is_v7 else (88 << 20)   # double-buffered working-set cap

    def ws_fused(tm_, tk_):
        return (2 * (tm_ * tk_ * x_bytes + 3 * tn_e * tk_ * 4 + 3 * tn_e * 4)
                + 2 * tm_ * tn_e * out_bytes
                + (tm_ * tn_e * 4 if use_scratch else 0))

    def ws_hoist(tm_, tk_):
        return (2 * (tm_ * tk_ * cdt_bytes + tn_e * tk_ * cdt_bytes + tn_e * 4)
                + 2 * tm_ * tn_e * out_bytes
                + (tm_ * tn_e * 4 if use_scratch else 0))

    if tk is not None:
        tk_cands = [min(_round_up(tk, 128), k_min)]
    else:
        tk_cands, seen = [], set()
        for t in (k_min, 4096, 2048, 1024, 512, 256, 128):
            t = min(t, k_min)
            if t not in seen:
                seen.add(t)
                tk_cands.append(t)
        tk_cands.sort(reverse=True)

    tm_req = None if tm is None else min(_round_up(tm, 8), m_min)

    fused = False
    tm_e = tk_e = None
    if tm_req is None or tm_req >= m_min:
        # Try the single-batch-tile fused-sampling path first.
        for tk_c in tk_cands:
            if ws_fused(m_min, tk_c) <= budget:
                fused, tm_e, tk_e = True, m_min, tk_c
                break

    if not fused:
        if tm_req is not None:
            tm_cands = [tm_req]
        else:
            tm_cands, t = [], min(m_min, 8192)
            while t >= 8:
                tm_cands.append(_round_up(t, 8))
                t //= 2
        for tm_c in tm_cands:
            for tk_c in tk_cands:
                if ws_hoist(tm_c, tk_c) <= budget:
                    tm_e, tk_e = tm_c, tk_c
                    break
            if tm_e is not None:
                break
        if tm_e is None:                 # last resort: tiny tiles always fit
            tn_e = min(tn_e, 128)
            tm_e, tk_e = min(256, m_min), min(512, k_min)

    # v7x has 2 TensorCores: guarantee >= 2 blocks on a parallel axis.
    if is_v7:
        m_tiles = _round_up(batch, tm_e) // tm_e
        n_tiles = _round_up(out_f, tn_e) // tn_e
        if m_tiles * n_tiles < 2:
            if tn_e >= 256 and tn_e % 256 == 0:
                tn_e //= 2
            elif tm_e >= 16 and tm_e % 16 == 0:
                tm_e //= 2

    m_p = _round_up(batch, tm_e)
    n_p = _round_up(out_f, tn_e)
    k_p = _round_up(in_f, tk_e)
    grid = (m_p // tm_e, n_p // tn_e, k_p // tk_e)

    scratch_shapes = [pltpu.VMEM((tm_e, tn_e), jnp.float32)] if use_scratch else []
    ws = (ws_fused if fused else ws_hoist)(tm_e, tk_e)
    vmem_limit = max(32 << 20, int(ws * 1.25) + (4 << 20))
    vmem_limit = min(vmem_limit, (60 << 20) if is_v7 else (124 << 20))
    cparams = pltpu.CompilerParams(
        dimension_semantics=("parallel", "parallel", "arbitrary"),
        vmem_limit_bytes=vmem_limit)

    if fused:
        # Zero-padding keeps the math exact: padded mu = eps = 0 -> padded weights = 0.
        xp = _pad2(x, m_p - batch, k_p - in_f)
        wmu = _pad2(weight_mu, n_p - out_f, k_p - in_f)
        wls = _pad2(weight_log_sigma, n_p - out_f, k_p - in_f)
        weps = _pad2(weight_eps, n_p - out_f, k_p - in_f)
        bmu = _pad_row(bias_mu, n_p - out_f)
        bls = _pad_row(bias_log_sigma, n_p - out_f)
        beps = _pad_row(bias_eps, n_p - out_f)

        kernel = functools.partial(_fused_kernel, compute_dtype=compute_dtype)
        out = pl.pallas_call(
            kernel,
            out_shape=jax.ShapeDtypeStruct((m_p, n_p), out_dtype),
            grid_spec=pltpu.PrefetchScalarGridSpec(
                num_scalar_prefetch=0,
                grid=grid,
                in_specs=[
                    pl.BlockSpec((tm_e, tk_e), lambda i, j, k: (i, k)),   # x
                    pl.BlockSpec((tn_e, tk_e), lambda i, j, k: (j, k)),   # weight_mu
                    pl.BlockSpec((tn_e, tk_e), lambda i, j, k: (j, k)),   # weight_log_sigma
                    pl.BlockSpec((tn_e, tk_e), lambda i, j, k: (j, k)),   # weight_eps
                    pl.BlockSpec((1, tn_e), lambda i, j, k: (0, j)),      # bias_mu
                    pl.BlockSpec((1, tn_e), lambda i, j, k: (0, j)),      # bias_log_sigma
                    pl.BlockSpec((1, tn_e), lambda i, j, k: (0, j)),      # bias_eps
                ],
                out_specs=pl.BlockSpec((tm_e, tn_e), lambda i, j, k: (i, j)),
                scratch_shapes=scratch_shapes,
            ),
            compiler_params=cparams,
        )(xp, wmu, wls, weps, bmu, bls, beps)
    else:
        # Hoisted sampling: one f32 elementwise pass (XLA fuses exp+mul+add), then the
        # sampled W is streamed once per batch tile in compute_dtype (bf16 by default).
        w = weight_mu + jnp.exp(weight_log_sigma) * weight_eps            # f32 sampling
        b = (bias_mu + jnp.exp(bias_log_sigma) * bias_eps).astype(jnp.float32)
        xc = x if x.dtype == jnp.dtype(compute_dtype) else x.astype(compute_dtype)
        wc = w if w.dtype == jnp.dtype(compute_dtype) else w.astype(compute_dtype)

        xp = _pad2(xc, m_p - batch, k_p - in_f)
        wp = _pad2(wc, n_p - out_f, k_p - in_f)
        bp = _pad_row(b, n_p - out_f)

        out = pl.pallas_call(
            _matmul_bias_kernel,
            out_shape=jax.ShapeDtypeStruct((m_p, n_p), out_dtype),
            grid_spec=pltpu.PrefetchScalarGridSpec(
                num_scalar_prefetch=0,
                grid=grid,
                in_specs=[
                    pl.BlockSpec((tm_e, tk_e), lambda i, j, k: (i, k)),   # x
                    pl.BlockSpec((tn_e, tk_e), lambda i, j, k: (j, k)),   # sampled W
                    pl.BlockSpec((1, tn_e), lambda i, j, k: (0, j)),      # sampled bias
                ],
                out_specs=pl.BlockSpec((tm_e, tn_e), lambda i, j, k: (i, j)),
                scratch_shapes=scratch_shapes,
            ),
            compiler_params=cparams,
        )(xp, wp, bp)

    if m_p == batch and n_p == out_f:
        return out
    return out[:batch, :out_f]


# --------------------------------------------------------------------------------------
# Demo / correctness checks
# --------------------------------------------------------------------------------------

if __name__ == "__main__":
    key = jax.random.PRNGKey(0)

    def make_problem(k, batch, in_f, out_f):
        k_x, k_wmu, k_bmu, k_weps, k_beps = jax.random.split(k, 5)
        # Mirrors the PyTorch __init__: weight_mu/bias_mu ~ U(-0.2,0.2), log_sigma = -5.
        weight_mu = jax.random.uniform(k_wmu, (out_f, in_f), minval=-0.2, maxval=0.2,
                                       dtype=jnp.float32)
        weight_log_sigma = jnp.full((out_f, in_f), -5.0, jnp.float32)
        bias_mu = jax.random.uniform(k_bmu, (out_f,), minval=-0.2, maxval=0.2,
                                     dtype=jnp.float32)
        bias_log_sigma = jnp.full((out_f,), -5.0, jnp.float32)
        # Reparameterization noise (torch.randn_like) drawn deterministically here.
        weight_eps = jax.random.normal(k_weps, (out_f, in_f), dtype=jnp.float32)
        bias_eps = jax.random.normal(k_beps, (out_f,), dtype=jnp.float32)
        x = jax.random.normal(k_x, (batch, in_f), dtype=jnp.float32)
        return x, weight_mu, weight_log_sigma, bias_mu, bias_log_sigma, weight_eps, bias_eps

    def reference(args):
        x, wmu, wls, bmu, bls, weps, beps = args
        w = wmu + jnp.exp(wls) * weps
        b = bmu + jnp.exp(bls) * beps
        return x @ w.T + b

    k1, k2, k3, _ = jax.random.split(key, 4)

    # 1) Small shape consistent with the module -> XLA fallback path.
    args = make_problem(k1, batch=8, in_f=32, out_f=32)
    out = jax.block_until_ready(
        bayesian_linear(*args, compute_dtype=jnp.float32))
    assert out.shape == (8, 32)
    assert jnp.allclose(out, reference(args), atol=1e-5, rtol=1e-5)

    # 2) Pallas fused path (single batch tile), f32 MXU path, tight check.
    args = make_problem(k2, batch=128, in_f=256, out_f=384)
    out = jax.block_until_ready(
        bayesian_linear(*args, compute_dtype=jnp.float32))
    assert out.shape == (128, 384)
    assert jnp.allclose(out, reference(args), atol=5e-4, rtol=5e-4)

    # 3) Same problem through the default bf16 MXU streaming path (looser tolerance).
    out_bf16 = jax.block_until_ready(bayesian_linear(*args))
    assert jnp.allclose(out_bf16, reference(args), atol=5e-2, rtol=5e-2)

    # 4) Pallas hoisted-sampling path (multiple batch tiles forced via tm override).
    args = make_problem(k3, batch=192, in_f=256, out_f=384)
    out = jax.block_until_ready(
        bayesian_linear(*args, compute_dtype=jnp.float32, tm=64))
    assert out.shape == (192, 384)
    assert jnp.allclose(out, reference(args), atol=5e-4, rtol=5e-4)

    print("KERNEL_OK")
</pallas_src>

<mosaic_0001>
module attributes {stable_mosaic.version = 11 : i64} {
  func.func @_fused_kernel(%arg0: i32, %arg1: i32, %arg2: i32, %arg3: memref<128x256xf32, #tpu.memory_space<vmem>>, %arg4: memref<128x256xf32, #tpu.memory_space<vmem>>, %arg5: memref<128x256xf32, #tpu.memory_space<vmem>>, %arg6: memref<128x256xf32, #tpu.memory_space<vmem>>, %arg7: memref<1x128xf32, #tpu.memory_space<vmem>>, %arg8: memref<1x128xf32, #tpu.memory_space<vmem>>, %arg9: memref<1x128xf32, #tpu.memory_space<vmem>>, %arg10: memref<128x128xf32, #tpu.memory_space<vmem>>) attributes {dimension_semantics = [#tpu.dimension_semantics<parallel>, #tpu.dimension_semantics<parallel>, #tpu.dimension_semantics<arbitrary>], iteration_bounds = array<i64: 1, 3, 1>, scalar_prefetch = 0 : i64, scratch_operands = 0 : i64, tpu.core_type = #tpu.core_type<tc>, window_params = [{transform_indices = @transform_0, window_bounds = array<i64: 128, 256>}, {transform_indices = @transform_1, window_bounds = array<i64: 128, 256>}, {transform_indices = @transform_2, window_bounds = array<i64: 128, 256>}, {transform_indices = @transform_3, window_bounds = array<i64: 128, 256>}, {transform_indices = @transform_4, window_bounds = array<i64: 1, 128>}, {transform_indices = @transform_5, window_bounds = array<i64: 1, 128>}, {transform_indices = @transform_6, window_bounds = array<i64: 1, 128>}, {transform_indices = @transform_7, window_bounds = array<i64: 128, 128>}]} {
    %c0 = arith.constant 0 : index
    %c0_0 = arith.constant 0 : index
    %0 = vector.load %arg4[%c0, %c0_0] : memref<128x256xf32, #tpu.memory_space<vmem>>, vector<128x256xf32>
    %c0_1 = arith.constant 0 : index
    %c0_2 = arith.constant 0 : index
    %1 = vector.load %arg5[%c0_1, %c0_2] : memref<128x256xf32, #tpu.memory_space<vmem>>, vector<128x256xf32>
    %2 = math.exp %1 : vector<128x256xf32>
    %c0_3 = arith.constant 0 : index
    %c0_4 = arith.constant 0 : index
    %3 = vector.load %arg6[%c0_3, %c0_4] : memref<128x256xf32, #tpu.memory_space<vmem>>, vector<128x256xf32>
    %4 = arith.mulf %2, %3 : vector<128x256xf32>
    %5 = arith.addf %0, %4 : vector<128x256xf32>
    %c0_5 = arith.constant 0 : index
    %c0_6 = arith.constant 0 : index
    %6 = vector.load %arg3[%c0_5, %c0_6] : memref<128x256xf32, #tpu.memory_space<vmem>>, vector<128x256xf32>
    %cst = arith.constant dense<0.000000e+00> : vector<128x128xf32>
    %7 = tpu.matmul %6, %5, %cst {dimension_numbers = #tpu.dot_dimension_numbers<[1], [1], [0], [0], [0, 0, 1, 0], [], []>} : vector<128x256xf32>, vector<128x256xf32>, vector<128x128xf32> -> vector<128x128xf32>
    %c0_i32 = arith.constant 0 : i32
    %8 = arith.cmpi eq, %arg2, %c0_i32 : i32
    %9 = arith.extui %8 : i1 to i32
    %c0_i32_7 = arith.constant 0 : i32
    %10 = arith.cmpi ne, %9, %c0_i32_7 : i32
    scf.if %10 {
      %c0_12 = arith.constant 0 : index
      %c0_13 = arith.constant 0 : index
      %17 = vector.load %arg10[%c0_12, %c0_13] : memref<128x128xf32, #tpu.memory_space<vmem>>, vector<128x128xf32>
      tpu.vector_store %arg10[%c0_12, %c0_13], %7 {strides = array<i32>} : memref<128x128xf32, #tpu.memory_space<vmem>>, vector<128x128xf32>,
    } else {
    }
    %c0_i32_8 = arith.constant 0 : i32
    %11 = arith.cmpi sgt, %arg2, %c0_i32_8 : i32
    %12 = arith.extui %11 : i1 to i32
    %c0_i32_9 = arith.constant 0 : i32
    %13 = arith.cmpi ne, %12, %c0_i32_9 : i32
    scf.if %13 {
      %c0_12 = arith.constant 0 : index
      %c0_13 = arith.constant 0 : index
      %17 = vector.load %arg10[%c0_12, %c0_13] : memref<128x128xf32, #tpu.memory_space<vmem>>, vector<128x128xf32>
      %18 = arith.addf %17, %7 : vector<128x128xf32>
      %c0_14 = arith.constant 0 : index
      %c0_15 = arith.constant 0 : index
      %19 = vector.load %arg10[%c0_14, %c0_15] : memref<128x128xf32, #tpu.memory_space<vmem>>, vector<128x128xf32>
      tpu.vector_store %arg10[%c0_14, %c0_15], %18 {strides = array<i32>} : memref<128x128xf32, #tpu.memory_space<vmem>>, vector<128x128xf32>,
    } else {
    }
    %c0_i32_10 = arith.constant 0 : i32
    %14 = arith.cmpi eq, %arg2, %c0_i32_10 : i32
    %15 = arith.extui %14 : i1 to i32
    %c0_i32_11 = arith.constant 0 : i32
    %16 = arith.cmpi ne, %15, %c0_i32_11 : i32
    scf.if %16 {
      %c0_12 = arith.constant 0 : index
      %c0_13 = arith.constant 0 : index
      %17 = vector.load %arg7[%c0_12, %c0_13] : memref<1x128xf32, #tpu.memory_space<vmem>>, vector<1x128xf32>
      %c0_14 = arith.constant 0 : index
      %c0_15 = arith.constant 0 : index
      %18 = vector.load %arg8[%c0_14, %c0_15] : memref<1x128xf32, #tpu.memory_space<vmem>>, vector<1x128xf32>
      %19 = math.exp %18 : vector<1x128xf32>
      %c0_16 = arith.constant 0 : index
      %c0_17 = arith.constant 0 : index
      %20 = vector.load %arg9[%c0_16, %c0_17] : memref<1x128xf32, #tpu.memory_space<vmem>>, vector<1x128xf32>
      %21 = arith.mulf %19, %20 : vector<1x128xf32>
      %22 = arith.addf %17, %21 : vector<1x128xf32>
      %c0_18 = arith.constant 0 : index
      %c0_19 = arith.constant 0 : index
      %23 = vector.load %arg10[%c0_18, %c0_19] : memref<128x128xf32, #tpu.memory_space<vmem>>, vector<128x128xf32>
      %24 = vector.broadcast %22 : vector<1x128xf32> to vector<128x128xf32>
      %25 = arith.addf %23, %24 : vector<128x128xf32>
      %c0_20 = arith.constant 0 : index
      %c0_21 = arith.constant 0 : index
      %26 = vector.load %arg10[%c0_20, %c0_21] : memref<128x128xf32, #tpu.memory_space<vmem>>, vector<128x128xf32>
      tpu.vector_store %arg10[%c0_20, %c0_21], %25 {strides = array<i32>} : memref<128x128xf32, #tpu.memory_space<vmem>>, vector<128x128xf32>,
    } else {
    }
    return
  }
  func.func @transform_0(%arg0: i32, %arg1: i32, %arg2: i32) -> (i32, i32) {
    %c0_i32 = arith.constant 0 : i32
    return %arg0, %arg2 : i32, i32
  }
  func.func @transform_1(%arg0: i32, %arg1: i32, %arg2: i32) -> (i32, i32) {
    %c0_i32 = arith.constant 0 : i32
    return %arg1, %arg2 : i32, i32
  }
  func.func @transform_2(%arg0: i32, %arg1: i32, %arg2: i32) -> (i32, i32) {
    %c0_i32 = arith.constant 0 : i32
    return %arg1, %arg2 : i32, i32
  }
  func.func @transform_3(%arg0: i32, %arg1: i32, %arg2: i32) -> (i32, i32) {
    %c0_i32 = arith.constant 0 : i32
    return %arg1, %arg2 : i32, i32
  }
  func.func @transform_4(%arg0: i32, %arg1: i32, %arg2: i32) -> (i32, i32) {
    %c0_i32 = arith.constant 0 : i32
    %c0_i32_0 = arith.constant 0 : i32
    return %c0_i32, %arg1 : i32, i32
  }
  func.func @transform_5(%arg0: i32, %arg1: i32, %arg2: i32) -> (i32, i32) {
    %c0_i32 = arith.constant 0 : i32
    %c0_i32_0 = arith.constant 0 : i32
    return %c0_i32, %arg1 : i32, i32
  }
  func.func @transform_6(%arg0: i32, %arg1: i32, %arg2: i32) -> (i32, i32) {
    %c0_i32 = arith.constant 0 : i32
    %c0_i32_0 = arith.constant 0 : i32
    return %c0_i32, %arg1 : i32, i32
  }
  func.func @transform_7(%arg0: i32, %arg1: i32, %arg2: i32) -> (i32, i32) {
    %c0_i32 = arith.constant 0 : i32
    return %arg0, %arg1 : i32, i32
  }
}

</mosaic_0001>

<llo_original>
// kernel: tpu_custom_call.1
$region0: #{tpu_custom_call.1}
  #allocation0 [shape = 'u32[]', space=smem, size = 0x4, offset = 0x4, fixed_abs, tag = 'smem constant byte address 0x4 - core index']
  #allocation1 [shape = 'u32[144,128]{1,0:T(1,128)}', space=vmem, size = 0x12000, scoped, tag = 'internal scratch']
  %s0 = inlined_call_operand.hbm [shape: f32[128,256], index: 0, kind: input, shape index: {}]
  %s1 = inlined_call_operand.hbm [shape: f32[384,256], index: 1, kind: input, shape index: {}]
  %s2 = inlined_call_operand.hbm [shape: f32[384,256], index: 2, kind: input, shape index: {}]
  %s3 = inlined_call_operand.hbm [shape: f32[384,256], index: 3, kind: input, shape index: {}]
  %s4 = inlined_call_operand.vmem [shape: f32[1,384], index: 4, kind: input, shape index: {}]
  %s5 = inlined_call_operand.vmem [shape: f32[1,384], index: 5, kind: input, shape index: {}]
  %s6 = inlined_call_operand.vmem [shape: f32[1,384], index: 6, kind: input, shape index: {}]
  %s7 = inlined_call_operand.hbm [shape: f32[128,384], index: 7, kind: output, shape index: {}]
  %s8 = sld [smem:[#allocation0]]
  $region89: #{tpu_custom_call.1} parent=0
    _
  %s10 = ssub.s32 1, %s8
  %s11 = scalar_select 0, %s10, %s8
  $region1: #{tpu_custom_call.1} parent=0
    #allocation2 [shape = 'u8[131072]{0}', space=vmem, size = 0x20000, scoped, tag = 'input window, operand 0, single buffered']
    #allocation3 [shape = 's32[2]{0}', space=sflag, size = 0x8, scoped, tag = 'scoped memory for tpu_custom_call.1']
    #allocation4 [shape = 's32[2]{0}', space=sflag, size = 0x8, scoped, tag = 'scoped memory for tpu_custom_call.1']
    #allocation5 [shape = 'u8[262144]{0}', space=vmem, size = 0x40000, scoped, tag = 'input window, operand 1']
    #allocation6 [shape = 's32[2]{0}', space=sflag, size = 0x8, scoped, tag = 'scoped memory for tpu_custom_call.1']
    #allocation7 [shape = 'u8[262144]{0}', space=vmem, size = 0x40000, scoped, tag = 'input window, operand 2']
    #allocation8 [shape = 'u8[262144]{0}', space=vmem, size = 0x40000, scoped, tag = 'input window, operand 3']
    #allocation9 [shape = 's32[2]{0}', space=sflag, size = 0x8, scoped, tag = 'scoped memory for tpu_custom_call.1']
    #allocation10 [shape = 'u8[131072]{0}', space=vmem, size = 0x20000, scoped, tag = 'output window, operand 0']
    %12 = vsyncpa [#allocation3], 0
    %13 = vsyncpa [#allocation6], 0
    %s14 = scalar_lea.sflag [#allocation6], 1
    %15 = vsyncpa %s14, 0
    %16 = vsyncpa [#allocation9], 0
    %s17 = scalar_lea.sflag [#allocation9], 1
    %18 = vsyncpa %s17, 0
    %19 = vsyncpa [#allocation4], 0
    %s20 = scalar_lea.sflag [#allocation4], 1
    %21 = vsyncpa %s20, 0
    loop: start=0, step=1, limit=5
    $region2: #{tpu_custom_call.1} parent=1 // loop_pre_header
      _
    $region3: #{tpu_custom_call.1} parent=1 // loop_header
      %s23 = sphi 0, %s27
      %p24 = scmp.ge.s32.totalorder %s23, 5
      %s30 = sphi 0, %s49
      %s31 = sphi 0, %s45
      %s32 = sphi 0, %s41
      %s33 = sphi 0, %s30
      %s34 = sphi 0, %s31
      %s35 = sphi 0, %s32
      %s36 = sphi 0, %s33
      %s37 = sphi 0, %s34
      %s38 = sphi 0, %s35
      %s54 = sphi 0, %s56
      %s57 = sphi 0, %s54
      %s58 = sphi 0, %s57
      %s74 = sphi 0, %s58
      %s82 = sphi 0, %s84
      %s85 = sphi 0, %s82
      %s86 = sphi 0, %s85
      %s102 = sphi 0, %s86
      %s110 = sphi 0, %s112
      %s113 = sphi 0, %s110
      %s114 = sphi 0, %s113
      %s130 = sphi 0, %s114
      %s138 = sphi 0, %s140
      %s141 = sphi 0, %s138
      %s142 = sphi 0, %s141
      %s158 = sphi 0, %s142
      %s164 = sphi 0, %s166
      %s167 = sphi 0, %s164
      %s168 = sphi 0, %s167
      %s184 = sphi 0, %s168
      %s190 = sphi 0, %s192
      %s193 = sphi 0, %s190
      %s194 = sphi 0, %s193
      %s210 = sphi 0, %s194
      %s216 = sphi 0, %s218
      %s219 = sphi 0, %s216
      %s220 = sphi 0, %s219
      %s236 = sphi 0, %s220
      %s244 = sphi 0, %s246
      %s247 = sphi 0, %s244
      %s248 = sphi 0, %s247
      %s264 = sphi 0, %s248
    $region4: #{tpu_custom_call.1} parent=1 // loop_header_branch
      %26 = sbr.rel (%p24) target = $region8
    $region5: #{tpu_custom_call.1} parent=1 // loop_body
      %s28 = ssub.s32 %s23, 1
      %s29 = ssub.s32 %s23, 2
      %s39 = sadd.s32 1, %s32
      %p40 = scmp.ge.s32.totalorder %s39, 1
      %s41 = scalar_select %p40, 0, %s39
      %s42 = sadd.s32 1, %s31
      %s43 = scalar_select %p40, %s42, %s31
      %p44 = scmp.ge.s32.totalorder %s43, 3
      %s45 = scalar_select %p44, 0, %s43
      %s46 = sadd.s32 1, %s30
      %s47 = scalar_select %p44, %s46, %s30
      %p48 = scmp.ge.s32.totalorder %s47, 1
      %s49 = scalar_select %p48, 0, %s47
      %s50 = ssub.s32 %s30, %s49
      %s51 = ssub.s32 %s32, %s41
      %s52 = sor.u32 %s50, %s51
      %p53 = scmp.eq.s32.totalorder %s52, 0
      %s55 = sadd.s32 %s54, 1
      %s56 = scalar_select %p53, %s54, %s55
      %p59 = pneg %p53
      %p60 = scmp.eq.s32.totalorder %s23, 2
      %p61 = por %p59, %p60
      %p62 = scmp.ne.s32.totalorder %s54, %s57
      %p63 = scmp.eq.s32.totalorder %s23, 0
      %p64 = por %p62, %p63
      %p65 = scmp.ne.s32.totalorder %s54, %s57
      %p66 = scmp.eq.s32.totalorder %s28, 2
      %p67 = por %p65, %p66
      %p68 = scmp.ne.s32.totalorder %s57, %s58
      %p69 = scmp.eq.s32.totalorder %s28, 0
      %p70 = por %p68, %p69
      %p71 = scmp.ne.s32.totalorder %s57, %s58
      %p72 = scmp.eq.s32.totalorder %s29, 2
      %p73 = por %p71, %p72
      %p75 = scmp.ne.s32.totalorder %s58, %s74
      %p76 = scmp.eq.s32.totalorder %s29, 0
      %p77 = por %p75, %p76
      %s78 = ssub.s32 %s31, %s45
      %s79 = ssub.s32 %s32, %s41
      %s80 = sor.u32 %s78, %s79
      %p81 = scmp.eq.s32.totalorder %s80, 0
      %s83 = sadd.s32 %s82, 1
      %s84 = scalar_select %p81, %s82, %s83
      %p87 = pneg %p81
      %p88 = scmp.eq.s32.totalorder %s23, 2
      %p89 = por %p87, %p88
      %p90 = scmp.ne.s32.totalorder %s82, %s85
      %p91 = scmp.eq.s32.totalorder %s23, 0
      %p92 = por %p90, %p91
      %p93 = scmp.ne.s32.totalorder %s82, %s85
      %p94 = scmp.eq.s32.totalorder %s28, 2
      %p95 = por %p93, %p94
      %p96 = scmp.ne.s32.totalorder %s85, %s86
      %p97 = scmp.eq.s32.totalorder %s28, 0
      %p98 = por %p96, %p97
      %p99 = scmp.ne.s32.totalorder %s85, %s86
      %p100 = scmp.eq.s32.totalorder %s29, 2
      %p101 = por %p99, %p100
      %p103 = scmp.ne.s32.totalorder %s86, %s102
      %p104 = scmp.eq.s32.totalorder %s29, 0
      %p105 = por %p103, %p104
      %s106 = ssub.s32 %s31, %s45
      %s107 = ssub.s32 %s32, %s41
      %s108 = sor.u32 %s106, %s107
      %p109 = scmp.eq.s32.totalorder %s108, 0
      %s111 = sadd.s32 %s110, 1
      %s112 = scalar_select %p109, %s110, %s111
      %p115 = pneg %p109
      %p116 = scmp.eq.s32.totalorder %s23, 2
      %p117 = por %p115, %p116
      %p118 = scmp.ne.s32.totalorder %s110, %s113
      %p119 = scmp.eq.s32.totalorder %s23, 0
      %p120 = por %p118, %p119
      %p121 = scmp.ne.s32.totalorder %s110, %s113
      %p122 = scmp.eq.s32.totalorder %s28, 2
      %p123 = por %p121, %p122
      %p124 = scmp.ne.s32.totalorder %s113, %s114
      %p125 = scmp.eq.s32.totalorder %s28, 0
      %p126 = por %p124, %p125
      %p127 = scmp.ne.s32.totalorder %s113, %s114
      %p128 = scmp.eq.s32.totalorder %s29, 2
      %p129 = por %p127, %p128
      %p131 = scmp.ne.s32.totalorder %s114, %s130
      %p132 = scmp.eq.s32.totalorder %s29, 0
      %p133 = por %p131, %p132
      %s134 = ssub.s32 %s31, %s45
      %s135 = ssub.s32 %s32, %s41
      %s136 = sor.u32 %s134, %s135
      %p137 = scmp.eq.s32.totalorder %s136, 0
      %s139 = sadd.s32 %s138, 1
      %s140 = scalar_select %p137, %s138, %s139
      %p143 = pneg %p137
      %p144 = scmp.eq.s32.totalorder %s23, 2
      %p145 = por %p143, %p144
      %p146 = scmp.ne.s32.totalorder %s138, %s141
      %p147 = scmp.eq.s32.totalorder %s23, 0
      %p148 = por %p146, %p147
      %p149 = scmp.ne.s32.totalorder %s138, %s141
      %p150 = scmp.eq.s32.totalorder %s28, 2
      %p151 = por %p149, %p150
      %p152 = scmp.ne.s32.totalorder %s141, %s142
      %p153 = scmp.eq.s32.totalorder %s28, 0
      %p154 = por %p152, %p153
      %p155 = scmp.ne.s32.totalorder %s141, %s142
      %p156 = scmp.eq.s32.totalorder %s29, 2
      %p157 = por %p155, %p156
      %p159 = scmp.ne.s32.totalorder %s142, %s158
      %p160 = scmp.eq.s32.totalorder %s29, 0
      %p161 = por %p159, %p160
      %s162 = ssub.s32 %s31, %s45
      %p163 = scmp.eq.s32.totalorder %s162, 0
      %s165 = sadd.s32 %s164, 1
      %s166 = scalar_select %p163, %s164, %s165
      %p169 = pneg %p163
      %p170 = scmp.eq.s32.totalorder %s23, 2
      %p171 = por %p169, %p170
      %p172 = scmp.ne.s32.totalorder %s164, %s167
      %p173 = scmp.eq.s32.totalorder %s23, 0
      %p174 = por %p172, %p173
      %p175 = scmp.ne.s32.totalorder %s164, %s167
      %p176 = scmp.eq.s32.totalorder %s28, 2
      %p177 = por %p175, %p176
      %p178 = scmp.ne.s32.totalorder %s167, %s168
      %p179 = scmp.eq.s32.totalorder %s28, 0
      %p180 = por %p178, %p179
      %p181 = scmp.ne.s32.totalorder %s167, %s168
      %p182 = scmp.eq.s32.totalorder %s29, 2
      %p183 = por %p181, %p182
      %p185 = scmp.ne.s32.totalorder %s168, %s184
      %p186 = scmp.eq.s32.totalorder %s29, 0
      %p187 = por %p185, %p186
      %s188 = ssub.s32 %s31, %s45
      %p189 = scmp.eq.s32.totalorder %s188, 0
      %s191 = sadd.s32 %s190, 1
      %s192 = scalar_select %p189, %s190, %s191
      %p195 = pneg %p189
      %p196 = scmp.eq.s32.totalorder %s23, 2
      %p197 = por %p195, %p196
      %p198 = scmp.ne.s32.totalorder %s190, %s193
      %p199 = scmp.eq.s32.totalorder %s23, 0
      %p200 = por %p198, %p199
      %p201 = scmp.ne.s32.totalorder %s190, %s193
      %p202 = scmp.eq.s32.totalorder %s28, 2
      %p203 = por %p201, %p202
      %p204 = scmp.ne.s32.totalorder %s193, %s194
      %p205 = scmp.eq.s32.totalorder %s28, 0
      %p206 = por %p204, %p205
      %p207 = scmp.ne.s32.totalorder %s193, %s194
      %p208 = scmp.eq.s32.totalorder %s29, 2
      %p209 = por %p207, %p208
      %p211 = scmp.ne.s32.totalorder %s194, %s210
      %p212 = scmp.eq.s32.totalorder %s29, 0
      %p213 = por %p211, %p212
      %s214 = ssub.s32 %s31, %s45
      %p215 = scmp.eq.s32.totalorder %s214, 0
      %s217 = sadd.s32 %s216, 1
      %s218 = scalar_select %p215, %s216, %s217
      %p221 = pneg %p215
      %p222 = scmp.eq.s32.totalorder %s23, 2
      %p223 = por %p221, %p222
      %p224 = scmp.ne.s32.totalorder %s216, %s219
      %p225 = scmp.eq.s32.totalorder %s23, 0
      %p226 = por %p224, %p225
      %p227 = scmp.ne.s32.totalorder %s216, %s219
      %p228 = scmp.eq.s32.totalorder %s28, 2
      %p229 = por %p227, %p228
      %p230 = scmp.ne.s32.totalorder %s219, %s220
      %p231 = scmp.eq.s32.totalorder %s28, 0
      %p232 = por %p230, %p231
      %p233 = scmp.ne.s32.totalorder %s219, %s220
      %p234 = scmp.eq.s32.totalorder %s29, 2
      %p235 = por %p233, %p234
      %p237 = scmp.ne.s32.totalorder %s220, %s236
      %p238 = scmp.eq.s32.totalorder %s29, 0
      %p239 = por %p237, %p238
      %s240 = ssub.s32 %s30, %s49
      %s241 = ssub.s32 %s31, %s45
      %s242 = sor.u32 %s240, %s241
      %p243 = scmp.eq.s32.totalorder %s242, 0
      %s245 = sadd.s32 %s244, 1
      %s246 = scalar_select %p243, %s244, %s245
      %p249 = pneg %p243
      %p250 = scmp.eq.s32.totalorder %s23, 2
      %p251 = por %p249, %p250
      %p252 = scmp.ne.s32.totalorder %s244, %s247
      %p253 = scmp.eq.s32.totalorder %s23, 0
      %p254 = por %p252, %p253
      %p255 = scmp.ne.s32.totalorder %s244, %s247
      %p256 = scmp.eq.s32.totalorder %s28, 2
      %p257 = por %p255, %p256
      %p258 = scmp.ne.s32.totalorder %s247, %s248
      %p259 = scmp.eq.s32.totalorder %s28, 0
      %p260 = por %p258, %p259
      %p261 = scmp.ne.s32.totalorder %s247, %s248
      %p262 = scmp.eq.s32.totalorder %s29, 2
      %p263 = por %p261, %p262
      %p265 = scmp.ne.s32.totalorder %s248, %s264
      %p266 = scmp.eq.s32.totalorder %s29, 0
      %p267 = por %p265, %p266
      %p268 = scmp.le.s32.totalorder 1, %s23
      %p269 = scmp.lt.s32.totalorder %s23, 4
      %p270 = pnand %p268, %p269
      %p271 = pneg %p270
      // Predicated region
      $region9: #{tpu_custom_call.1} parent=5 // pred_check
        _
      $region10: #{tpu_custom_call.1} parent=5 // pred_check_branch
        %273 = sbr.rel (%p270) target = $region12
      $region11: #{tpu_custom_call.1} parent=5 // pred_region
        %s274 = ssub.s32 %s23, 1
        // Predicated region
        $region13: #{tpu_custom_call.1} parent=11 // pred_check
          %p275 = pneg %p70
        $region14: #{tpu_custom_call.1} parent=11 // pred_check_branch
          %277 = sbr.rel (%p275) target = $region16
        $region15: #{tpu_custom_call.1} parent=11 // pred_region
          %s278 = smul.u32 16, %s33
          %s279 = smul.u32 2, %s35
          %s281 = ssub.s32 4096, 4096
          %282 = vsyncadd [#allocation3], %s281
          %s283 = smul.addr %s278, 2
          %s284 = sadd.s32 %s279, %s283
          %s285 = smul.addr %s284, 128
          %s286 = scalar_lea.hbm %s0, %s285
          %s287 = sshll.u32 [#allocation2], 4
          %s288 = int_to_ptr.vmem [resolvable:$true] %s287
          %293 = dma.hbm_to_vmem [thread:$0]  %s286, 4096, %s288, [#allocation3], 256, 256, 16
        $region16: #{tpu_custom_call.1} parent=11 // pred_fallthru
          _
      $region12: #{tpu_custom_call.1} parent=5 // pred_fallthru
        _
      %p294 = scmp.lt.s32.totalorder %s23, 3
      // Predicated region
      $region17: #{tpu_custom_call.1} parent=5 // pred_check
        %p295 = pneg %p294
      $region18: #{tpu_custom_call.1} parent=5 // pred_check_branch
        %297 = sbr.rel (%p295) target = $region20
      $region19: #{tpu_custom_call.1} parent=5 // pred_region
        // Predicated region
        $region21: #{tpu_custom_call.1} parent=19 // pred_check
          %p298 = pneg %p92
        $region22: #{tpu_custom_call.1} parent=19 // pred_check_branch
          %300 = sbr.rel (%p298) target = $region24
        $region23: #{tpu_custom_call.1} parent=19 // pred_region
          %s301 = sand.u32 %s23, 1
          %s302 = scalar_lea.sflag [#allocation6], %s301
          %s303 = sand.u32 %s82, 1
          %s304 = smul.addr %s303, 256
          %s305 = scalar_lea.vmem [#allocation5], %s304
          %s306 = smul.u32 16, %s31
          %s307 = smul.u32 2, %s32
          %s309 = ssub.s32 4096, 4096
          %310 = vsyncadd %s302, %s309
          %s311 = smul.addr %s306, 2
          %s312 = sadd.s32 %s307, %s311
          %s313 = smul.addr %s312, 128
          %s314 = scalar_lea.hbm %s1, %s313
          %s315 = sshll.u32 %s305, 4
          %s316 = int_to_ptr.vmem [resolvable:$true] %s315
          %321 = dma.hbm_to_vmem [thread:$0]  %s314, 4096, %s316, %s302, 256, 256, 16
        $region24: #{tpu_custom_call.1} parent=19 // pred_fallthru
          _
        // Predicated region
        $region25: #{tpu_custom_call.1} parent=19 // pred_check
          %p322 = pneg %p120
        $region26: #{tpu_custom_call.1} parent=19 // pred_check_branch
          %324 = sbr.rel (%p322) target = $region28
        $region27: #{tpu_custom_call.1} parent=19 // pred_region
          %s325 = sand.u32 %s23, 1
          %s326 = scalar_lea.sflag [#allocation6], %s325
          %s327 = sand.u32 %s110, 1
          %s328 = smul.addr %s327, 256
          %s329 = scalar_lea.vmem [#allocation7], %s328
          %s330 = smul.u32 16, %s31
          %s331 = smul.u32 2, %s32
          %s333 = ssub.s32 4096, 4096
          %334 = vsyncadd %s326, %s333
          %s335 = smul.addr %s330, 2
          %s336 = sadd.s32 %s331, %s335
          %s337 = smul.addr %s336, 128
          %s338 = scalar_lea.hbm %s2, %s337
          %s339 = sshll.u32 %s329, 4
          %s340 = int_to_ptr.vmem [resolvable:$true] %s339
          %345 = dma.hbm_to_vmem [thread:$0]  %s338, 4096, %s340, %s326, 256, 256, 16
        $region28: #{tpu_custom_call.1} parent=19 // pred_fallthru
          _
        // Predicated region
        $region29: #{tpu_custom_call.1} parent=19 // pred_check
          %p346 = pneg %p148
        $region30: #{tpu_custom_call.1} parent=19 // pred_check_branch
          %348 = sbr.rel (%p346) target = $region32
        $region31: #{tpu_custom_call.1} parent=19 // pred_region
          %s349 = sand.u32 %s138, 1
          %s350 = scalar_lea.sflag [#allocation9], %s349
          %s351 = sand.u32 %s138, 1
          %s352 = smul.addr %s351, 256
          %s353 = scalar_lea.vmem [#allocation8], %s352
          %s354 = smul.u32 16, %s31
          %s355 = smul.u32 2, %s32
          %s357 = ssub.s32 4096, 4096
          %358 = vsyncadd %s350, %s357
          %s359 = smul.addr %s354, 2
          %s360 = sadd.s32 %s355, %s359
          %s361 = smul.addr %s360, 128
          %s362 = scalar_lea.hbm %s3, %s361
          %s363 = sshll.u32 %s353, 4
          %s364 = int_to_ptr.vmem [resolvable:$true] %s363
          %369 = dma.hbm_to_vmem [thread:$0]  %s362, 4096, %s364, %s350, 256, 256, 16
        $region32: #{tpu_custom_call.1} parent=19 // pred_fallthru
          _
        // Predicated region
        $region33: #{tpu_custom_call.1} parent=19 // pred_check
          %p370 = pneg %p174
        $region34: #{tpu_custom_call.1} parent=19 // pred_check_branch
          %372 = sbr.rel (%p370) target = $region36
        $region35: #{tpu_custom_call.1} parent=19 // pred_region
          %p373 = scmp.lt.s32.totalorder %s31, 2
          %s374 = scalar_select %p373, %s31, 2
          %s375 = scalar_lea.vmem %s4, %s374
        $region36: #{tpu_custom_call.1} parent=19 // pred_fallthru
          _
        // Predicated region
        $region37: #{tpu_custom_call.1} parent=19 // pred_check
          %p376 = pneg %p200
        $region38: #{tpu_custom_call.1} parent=19 // pred_check_branch
          %378 = sbr.rel (%p376) target = $region40
        $region39: #{tpu_custom_call.1} parent=19 // pred_region
          %p379 = scmp.lt.s32.totalorder %s31, 2
          %s380 = scalar_select %p379, %s31, 2
          %s381 = scalar_lea.vmem %s5, %s380
        $region40: #{tpu_custom_call.1} parent=19 // pred_fallthru
          _
        // Predicated region
        $region41: #{tpu_custom_call.1} parent=19 // pred_check
          %p382 = pneg %p226
        $region42: #{tpu_custom_call.1} parent=19 // pred_check_branch
          %384 = sbr.rel (%p382) target = $region44
        $region43: #{tpu_custom_call.1} parent=19 // pred_region
          %p385 = scmp.lt.s32.totalorder %s31, 2
          %s386 = scalar_select %p385, %s31, 2
          %s387 = scalar_lea.vmem %s6, %s386
        $region44: #{tpu_custom_call.1} parent=19 // pred_fallthru
          _
      $region20: #{tpu_custom_call.1} parent=5 // pred_fallthru
        _
      %p388 = scmp.le.s32.totalorder 1, %s23
      %p389 = scmp.lt.s32.totalorder %s23, 4
      %p390 = pnand %p388, %p389
      %p391 = pneg %p390
      // Predicated region
      $region45: #{tpu_custom_call.1} parent=5 // pred_check
        _
      $region46: #{tpu_custom_call.1} parent=5 // pred_check_branch
        %393 = sbr.rel (%p390) target = $region48
      $region47: #{tpu_custom_call.1} parent=5 // pred_region
        %s394 = ssub.s32 %s23, 1
        // Predicated region
        $region49: #{tpu_custom_call.1} parent=47 // pred_check
          %p395 = pneg %p70
        $region50: #{tpu_custom_call.1} parent=47 // pred_check_branch
          %397 = sbr.rel (%p395) target = $region52
        $region51: #{tpu_custom_call.1} parent=47 // pred_region
          %398 = dma.done [#allocation3], 4096
        $region52: #{tpu_custom_call.1} parent=47 // pred_fallthru
          _
        %s399 = sand.u32 %s28, 1
        %s400 = scalar_lea.sflag [#allocation6], %s399
        %s401 = sand.u32 %s85, 1
        %s402 = smul.addr %s401, 256
        %s403 = scalar_lea.vmem [#allocation5], %s402
        // Predicated region
        $region53: #{tpu_custom_call.1} parent=47 // pred_check
          %p404 = pneg %p98
        $region54: #{tpu_custom_call.1} parent=47 // pred_check_branch
          %406 = sbr.rel (%p404) target = $region56
        $region55: #{tpu_custom_call.1} parent=47 // pred_region
          %407 = dma.done %s400, 4096
        $region56: #{tpu_custom_call.1} parent=47 // pred_fallthru
          _
        %s408 = sand.u32 %s28, 1
        %s409 = scalar_lea.sflag [#allocation6], %s408
        %s410 = sand.u32 %s113, 1
        %s411 = smul.addr %s410, 256
        %s412 = scalar_lea.vmem [#allocation7], %s411
        // Predicated region
        $region57: #{tpu_custom_call.1} parent=47 // pred_check
          %p413 = pneg %p126
        $region58: #{tpu_custom_call.1} parent=47 // pred_check_branch
          %415 = sbr.rel (%p413) target = $region60
        $region59: #{tpu_custom_call.1} parent=47 // pred_region
          %416 = dma.done %s409, 4096
        $region60: #{tpu_custom_call.1} parent=47 // pred_fallthru
          _
        %s417 = sand.u32 %s141, 1
        %s418 = scalar_lea.sflag [#allocation9], %s417
        %s419 = sand.u32 %s141, 1
        %s420 = smul.addr %s419, 256
        %s421 = scalar_lea.vmem [#allocation8], %s420
        // Predicated region
        $region61: #{tpu_custom_call.1} parent=47 // pred_check
          %p422 = pneg %p154
        $region62: #{tpu_custom_call.1} parent=47 // pred_check_branch
          %424 = sbr.rel (%p422) target = $region64
        $region63: #{tpu_custom_call.1} parent=47 // pred_region
          %425 = dma.done %s418, 4096
        $region64: #{tpu_custom_call.1} parent=47 // pred_fallthru
          _
        %p426 = pneg %p70
        %p427 = pneg %p67
        %s428 = sand.u32 %s28, 1
        %s429 = scalar_lea.sflag [#allocation6], %s428
        %s430 = sand.u32 %s85, 1
        %s431 = smul.addr %s430, 256
        %s432 = scalar_lea.vmem [#allocation5], %s431
        %p433 = pneg %p98
        %p434 = pneg %p95
        %s435 = sand.u32 %s28, 1
        %s436 = scalar_lea.sflag [#allocation6], %s435
        %s437 = sand.u32 %s113, 1
        %s438 = smul.addr %s437, 256
        %s439 = scalar_lea.vmem [#allocation7], %s438
        %p440 = pneg %p126
        %p441 = pneg %p123
        %s442 = sand.u32 %s141, 1
        %s443 = scalar_lea.sflag [#allocation9], %s442
        %s444 = sand.u32 %s141, 1
        %s445 = smul.addr %s444, 256
        %s446 = scalar_lea.vmem [#allocation8], %s445
        %p447 = pneg %p154
        %p448 = pneg %p151
        %p449 = scmp.lt.s32.totalorder %s34, 2
        %s450 = scalar_select %p449, %s34, 2
        %s451 = scalar_lea.vmem %s4, %s450
        %p452 = pneg %p180
        %p453 = pneg %p177
        %p454 = scmp.lt.s32.totalorder %s34, 2
        %s455 = scalar_select %p454, %s34, 2
        %s456 = scalar_lea.vmem %s5, %s455
        %p457 = pneg %p206
        %p458 = pneg %p203
        %p459 = scmp.lt.s32.totalorder %s34, 2
        %s460 = scalar_select %p459, %s34, 2
        %s461 = scalar_lea.vmem %s6, %s460
        %p462 = pneg %p232
        %p463 = pneg %p229
        %p464 = pneg %p260
        %p465 = pneg %p257
        %s466 = sand.u32 %s247, 1
        %s467 = scalar_lea.sflag [#allocation4], %s466
        %s468 = sand.u32 %s247, 1
        %s469 = smul.addr %s468, 128
        %s470 = scalar_lea.vmem [#allocation10], %s469
        %s471 = smul.u32 16, %s33
        %s472 = smul.u32 2, %s35
        %s473 = smul.u32 16, %s34
        %s474 = smul.u32 2, %s35
        %s475 = smul.u32 16, %s34
        %s476 = smul.u32 2, %s35
        %s477 = smul.u32 16, %s34
        %s478 = smul.u32 2, %s35
        %p479 = scmp.lt.s32.totalorder %s34, 2
        %s480 = scalar_select %p479, %s34, 2
        %s481 = scalar_lea.vmem %s4, %s480
        %p482 = scmp.lt.s32.totalorder %s34, 2
        %s483 = scalar_select %p482, %s34, 2
        %s484 = scalar_lea.vmem %s5, %s483
        %p485 = scmp.lt.s32.totalorder %s34, 2
        %s486 = scalar_select %p485, %s34, 2
        %s487 = scalar_lea.vmem %s6, %s486
        %s488 = smul.u32 16, %s33
        %v489 = vld [vmem:[%s403] sm:$0xff]
        %v490 = vld [vmem:[%s403 + $0x8] sm:$0xff]
        %v491 = vld [vmem:[%s403 + $0x10] sm:$0xff]
        %v492 = vld [vmem:[%s403 + $0x18] sm:$0xff]
        %v493 = vld [vmem:[%s403 + $0x20] sm:$0xff]
        %v494 = vld [vmem:[%s403 + $0x28] sm:$0xff]
        %v495 = vld [vmem:[%s403 + $0x30] sm:$0xff]
        %v496 = vld [vmem:[%s403 + $0x38] sm:$0xff]
        %v497 = vld [vmem:[%s403 + $0x40] sm:$0xff]
        %v498 = vld [vmem:[%s403 + $0x48] sm:$0xff]
        %v499 = vld [vmem:[%s403 + $0x50] sm:$0xff]
        %v500 = vld [vmem:[%s403 + $0x58] sm:$0xff]
        %v501 = vld [vmem:[%s403 + $0x60] sm:$0xff]
        %v502 = vld [vmem:[%s403 + $0x68] sm:$0xff]
        %v503 = vld [vmem:[%s403 + $0x70] sm:$0xff]
        %v504 = vld [vmem:[%s403 + $0x78] sm:$0xff]
        %v505 = vld [vmem:[%s403 + $0x80] sm:$0xff]
        %v506 = vld [vmem:[%s403 + $0x88] sm:$0xff]
        %v507 = vld [vmem:[%s403 + $0x90] sm:$0xff]
        %v508 = vld [vmem:[%s403 + $0x98] sm:$0xff]
        %v509 = vld [vmem:[%s403 + $0xa0] sm:$0xff]
        %v510 = vld [vmem:[%s403 + $0xa8] sm:$0xff]
        %v511 = vld [vmem:[%s403 + $0xb0] sm:$0xff]
        %v512 = vld [vmem:[%s403 + $0xb8] sm:$0xff]
        %v513 = vld [vmem:[%s403 + $0xc0] sm:$0xff]
        %v514 = vld [vmem:[%s403 + $0xc8] sm:$0xff]
        %v515 = vld [vmem:[%s403 + $0xd0] sm:$0xff]
        %v516 = vld [vmem:[%s403 + $0xd8] sm:$0xff]
        %v517 = vld [vmem:[%s403 + $0xe0] sm:$0xff]
        %v518 = vld [vmem:[%s403 + $0xe8] sm:$0xff]
        %v519 = vld [vmem:[%s403 + $0xf0] sm:$0xff]
        %v520 = vld [vmem:[%s403 + $0xf8] sm:$0xff]
        %v521 = vld [vmem:[%s412] sm:$0xff]
        %v522 = vld [vmem:[%s412 + $0x8] sm:$0xff]
        %v523 = vld [vmem:[%s412 + $0x10] sm:$0xff]
        %v524 = vld [vmem:[%s412 + $0x18] sm:$0xff]
        %v525 = vld [vmem:[%s412 + $0x20] sm:$0xff]
        %v526 = vld [vmem:[%s412 + $0x28] sm:$0xff]
        %v527 = vld [vmem:[%s412 + $0x30] sm:$0xff]
        %v528 = vld [vmem:[%s412 + $0x38] sm:$0xff]
        %v529 = vld [vmem:[%s412 + $0x40] sm:$0xff]
        %v530 = vld [vmem:[%s412 + $0x48] sm:$0xff]
        %v531 = vld [vmem:[%s412 + $0x50] sm:$0xff]
        %v532 = vld [vmem:[%s412 + $0x58] sm:$0xff]
        %v533 = vld [vmem:[%s412 + $0x60] sm:$0xff]
        %v534 = vld [vmem:[%s412 + $0x68] sm:$0xff]
        %v535 = vld [vmem:[%s412 + $0x70] sm:$0xff]
        %v536 = vld [vmem:[%s412 + $0x78] sm:$0xff]
        %v537 = vld [vmem:[%s412 + $0x80] sm:$0xff]
        %v538 = vld [vmem:[%s412 + $0x88] sm:$0xff]
        %v539 = vld [vmem:[%s412 + $0x90] sm:$0xff]
        %v540 = vld [vmem:[%s412 + $0x98] sm:$0xff]
        %v541 = vld [vmem:[%s412 + $0xa0] sm:$0xff]
        %v542 = vld [vmem:[%s412 + $0xa8] sm:$0xff]
        %v543 = vld [vmem:[%s412 + $0xb0] sm:$0xff]
        %v544 = vld [vmem:[%s412 + $0xb8] sm:$0xff]
        %v545 = vld [vmem:[%s412 + $0xc0] sm:$0xff]
        %v546 = vld [vmem:[%s412 + $0xc8] sm:$0xff]
        %v547 = vld [vmem:[%s412 + $0xd0] sm:$0xff]
        %v548 = vld [vmem:[%s412 + $0xd8] sm:$0xff]
        %v549 = vld [vmem:[%s412 + $0xe0] sm:$0xff]
        %v550 = vld [vmem:[%s412 + $0xe8] sm:$0xff]
        %v551 = vld [vmem:[%s412 + $0xf0] sm:$0xff]
        %v552 = vld [vmem:[%s412 + $0xf8] sm:$0xff]
        %v553 = vmul.f32 %v521, 1.442695
        %v554 = vpow.pop %v553
        %v555 = vmul.f32 %v522, 1.442695
        %v556 = vpow.pop %v555
        %v557 = vmul.f32 %v523, 1.442695
        %v558 = vpow.pop %v557
        %v559 = vmul.f32 %v524, 1.442695
        %v560 = vpow.pop %v559
        %v561 = vmul.f32 %v525, 1.442695
        %v562 = vpow.pop %v561
        %v563 = vmul.f32 %v526, 1.442695
        %v564 = vpow.pop %v563
        %v565 = vmul.f32 %v527, 1.442695
        %v566 = vpow.pop %v565
        %v567 = vmul.f32 %v528, 1.442695
        %v568 = vpow.pop %v567
        %v569 = vmul.f32 %v529, 1.442695
        %v570 = vpow.pop %v569
        %v571 = vmul.f32 %v530, 1.442695
        %v572 = vpow.pop %v571
        %v573 = vmul.f32 %v531, 1.442695
        %v574 = vpow.pop %v573
        %v575 = vmul.f32 %v532, 1.442695
        %v576 = vpow.pop %v575
        %v577 = vmul.f32 %v533, 1.442695
        %v578 = vpow.pop %v577
        %v579 = vmul.f32 %v534, 1.442695
        %v580 = vpow.pop %v579
        %v581 = vmul.f32 %v535, 1.442695
        %v582 = vpow.pop %v581
        %v583 = vmul.f32 %v536, 1.442695
        %v584 = vpow.pop %v583
        %v585 = vmul.f32 %v537, 1.442695
        %v586 = vpow.pop %v585
        %v587 = vmul.f32 %v538, 1.442695
        %v588 = vpow.pop %v587
        %v589 = vmul.f32 %v539, 1.442695
        %v590 = vpow.pop %v589
        %v591 = vmul.f32 %v540, 1.442695
        %v592 = vpow.pop %v591
        %v593 = vmul.f32 %v541, 1.442695
        %v594 = vpow.pop %v593
        %v595 = vmul.f32 %v542, 1.442695
        %v596 = vpow.pop %v595
        %v597 = vmul.f32 %v543, 1.442695
        %v598 = vpow.pop %v597
        %v599 = vmul.f32 %v544, 1.442695
        %v600 = vpow.pop %v599
        %v601 = vmul.f32 %v545, 1.442695
        %v602 = vpow.pop %v601
        %v603 = vmul.f32 %v546, 1.442695
        %v604 = vpow.pop %v603
        %v605 = vmul.f32 %v547, 1.442695
        %v606 = vpow.pop %v605
        %v607 = vmul.f32 %v548, 1.442695
        %v608 = vpow.pop %v607
        %v609 = vmul.f32 %v549, 1.442695
        %v610 = vpow.pop %v609
        %v611 = vmul.f32 %v550, 1.442695
        %v612 = vpow.pop %v611
        %v613 = vmul.f32 %v551, 1.442695
        %v614 = vpow.pop %v613
        %v615 = vmul.f32 %v552, 1.442695
        %v616 = vpow.pop %v615
        %v617 = vld [vmem:[%s421] sm:$0xff]
        %v618 = vld [vmem:[%s421 + $0x8] sm:$0xff]
        %v619 = vld [vmem:[%s421 + $0x10] sm:$0xff]
        %v620 = vld [vmem:[%s421 + $0x18] sm:$0xff]
        %v621 = vld [vmem:[%s421 + $0x20] sm:$0xff]
        %v622 = vld [vmem:[%s421 + $0x28] sm:$0xff]
        %v623 = vld [vmem:[%s421 + $0x30] sm:$0xff]
        %v624 = vld [vmem:[%s421 + $0x38] sm:$0xff]
        %v625 = vld [vmem:[%s421 + $0x40] sm:$0xff]
        %v626 = vld [vmem:[%s421 + $0x48] sm:$0xff]
        %v627 = vld [vmem:[%s421 + $0x50] sm:$0xff]
        %v628 = vld [vmem:[%s421 + $0x58] sm:$0xff]
        %v629 = vld [vmem:[%s421 + $0x60] sm:$0xff]
        %v630 = vld [vmem:[%s421 + $0x68] sm:$0xff]
        %v631 = vld [vmem:[%s421 + $0x70] sm:$0xff]
        %v632 = vld [vmem:[%s421 + $0x78] sm:$0xff]
        %v633 = vld [vmem:[%s421 + $0x80] sm:$0xff]
        %v634 = vld [vmem:[%s421 + $0x88] sm:$0xff]
        %v635 = vld [vmem:[%s421 + $0x90] sm:$0xff]
        %v636 = vld [vmem:[%s421 + $0x98] sm:$0xff]
        %v637 = vld [vmem:[%s421 + $0xa0] sm:$0xff]
        %v638 = vld [vmem:[%s421 + $0xa8] sm:$0xff]
        %v639 = vld [vmem:[%s421 + $0xb0] sm:$0xff]
        %v640 = vld [vmem:[%s421 + $0xb8] sm:$0xff]
        %v641 = vld [vmem:[%s421 + $0xc0] sm:$0xff]
        %v642 = vld [vmem:[%s421 + $0xc8] sm:$0xff]
        %v643 = vld [vmem:[%s421 + $0xd0] sm:$0xff]
        %v644 = vld [vmem:[%s421 + $0xd8] sm:$0xff]
        %v645 = vld [vmem:[%s421 + $0xe0] sm:$0xff]
        %v646 = vld [vmem:[%s421 + $0xe8] sm:$0xff]
        %v647 = vld [vmem:[%s421 + $0xf0] sm:$0xff]
        %v648 = vld [vmem:[%s421 + $0xf8] sm:$0xff]
        %v649 = vmul.f32 %v554, %v617
        %v650 = vmul.f32 %v556, %v618
        %v651 = vmul.f32 %v558, %v619
        %v652 = vmul.f32 %v560, %v620
        %v653 = vmul.f32 %v562, %v621
        %v654 = vmul.f32 %v564, %v622
        %v655 = vmul.f32 %v566, %v623
        %v656 = vmul.f32 %v568, %v624
        %v657 = vmul.f32 %v570, %v625
        %v658 = vmul.f32 %v572, %v626
        %v659 = vmul.f32 %v574, %v627
        %v660 = vmul.f32 %v576, %v628
        %v661 = vmul.f32 %v578, %v629
        %v662 = vmul.f32 %v580, %v630
        %v663 = vmul.f32 %v582, %v631
        %v664 = vmul.f32 %v584, %v632
        %v665 = vmul.f32 %v586, %v633
        %v666 = vmul.f32 %v588, %v634
        %v667 = vmul.f32 %v590, %v635
        %v668 = vmul.f32 %v592, %v636
        %v669 = vmul.f32 %v594, %v637
        %v670 = vmul.f32 %v596, %v638
        %v671 = vmul.f32 %v598, %v639
        %v672 = vmul.f32 %v600, %v640
        %v673 = vmul.f32 %v602, %v641
        %v674 = vmul.f32 %v604, %v642
        %v675 = vmul.f32 %v606, %v643
        %v676 = vmul.f32 %v608, %v644
        %v677 = vmul.f32 %v610, %v645
        %v678 = vmul.f32 %v612, %v646
        %v679 = vmul.f32 %v614, %v647
        %v680 = vmul.f32 %v616, %v648
        %v681 = vadd.f32 %v489, %v649
        %v682 = vadd.f32 %v490, %v650
        %v683 = vadd.f32 %v491, %v651
        %v684 = vadd.f32 %v492, %v652
        %v685 = vadd.f32 %v493, %v653
        %v686 = vadd.f32 %v494, %v654
        %v687 = vadd.f32 %v495, %v655
        %v688 = vadd.f32 %v496, %v656
        %v689 = vadd.f32 %v497, %v657
        %v690 = vadd.f32 %v498, %v658
        %v691 = vadd.f32 %v499, %v659
        %v692 = vadd.f32 %v500, %v660
        %v693 = vadd.f32 %v501, %v661
        %v694 = vadd.f32 %v502, %v662
        %v695 = vadd.f32 %v503, %v663
        %v696 = vadd.f32 %v504, %v664
        %v697 = vadd.f32 %v505, %v665
        %v698 = vadd.f32 %v506, %v666
        %v699 = vadd.f32 %v507, %v667
        %v700 = vadd.f32 %v508, %v668
        %v701 = vadd.f32 %v509, %v669
        %v702 = vadd.f32 %v510, %v670
        %v703 = vadd.f32 %v511, %v671
        %v704 = vadd.f32 %v512, %v672
        %v705 = vadd.f32 %v513, %v673
        %v706 = vadd.f32 %v514, %v674
        %v707 = vadd.f32 %v515, %v675
        %v708 = vadd.f32 %v516, %v676
        %v709 = vadd.f32 %v517, %v677
        %v710 = vadd.f32 %v518, %v678
        %v711 = vadd.f32 %v519, %v679
        %v712 = vadd.f32 %v520, %v680
        %v713 = vld [vmem:[#allocation2] sm:$0xff]
        %v714 = vld [vmem:[#allocation2 + $0x8] sm:$0xff]
        %v715 = vld [vmem:[#allocation2 + $0x10] sm:$0xff]
        %v716 = vld [vmem:[#allocation2 + $0x18] sm:$0xff]
        %v717 = vld [vmem:[#allocation2 + $0x20] sm:$0xff]
        %v718 = vld [vmem:[#allocation2 + $0x28] sm:$0xff]
        %v719 = vld [vmem:[#allocation2 + $0x30] sm:$0xff]
        %v720 = vld [vmem:[#allocation2 + $0x38] sm:$0xff]
        %v721 = vld [vmem:[#allocation2 + $0x40] sm:$0xff]
        %v722 = vld [vmem:[#allocation2 + $0x48] sm:$0xff]
        %v723 = vld [vmem:[#allocation2 + $0x50] sm:$0xff]
        %v724 = vld [vmem:[#allocation2 + $0x58] sm:$0xff]
        %v725 = vld [vmem:[#allocation2 + $0x60] sm:$0xff]
        %v726 = vld [vmem:[#allocation2 + $0x68] sm:$0xff]
        %v727 = vld [vmem:[#allocation2 + $0x70] sm:$0xff]
        %v728 = vld [vmem:[#allocation2 + $0x78] sm:$0xff]
        %v729 = vld [vmem:[#allocation2 + $0x80] sm:$0xff]
        %v730 = vld [vmem:[#allocation2 + $0x88] sm:$0xff]
        %v731 = vld [vmem:[#allocation2 + $0x90] sm:$0xff]
        %v732 = vld [vmem:[#allocation2 + $0x98] sm:$0xff]
        %v733 = vld [vmem:[#allocation2 + $0xa0] sm:$0xff]
        %v734 = vld [vmem:[#allocation2 + $0xa8] sm:$0xff]
        %v735 = vld [vmem:[#allocation2 + $0xb0] sm:$0xff]
        %v736 = vld [vmem:[#allocation2 + $0xb8] sm:$0xff]
        %v737 = vld [vmem:[#allocation2 + $0xc0] sm:$0xff]
        %v738 = vld [vmem:[#allocation2 + $0xc8] sm:$0xff]
        %v739 = vld [vmem:[#allocation2 + $0xd0] sm:$0xff]
        %v740 = vld [vmem:[#allocation2 + $0xd8] sm:$0xff]
        %v741 = vld [vmem:[#allocation2 + $0xe0] sm:$0xff]
        %v742 = vld [vmem:[#allocation2 + $0xe8] sm:$0xff]
        %v743 = vld [vmem:[#allocation2 + $0xf0] sm:$0xff]
        %v744 = vld [vmem:[#allocation2 + $0xf8] sm:$0xff]
        %745 = vmatprep.subr.mxu0 %v682
        %746 = vmatpush1.xpose.msra.mxu0 %v681
        %747 = vmatprep.subr.mxu0 %v684
        %748 = vmatpush1.xpose.msra.mxu0 %v683
        %749 = vmatprep.subr.mxu0 %v686
        %750 = vmatpush1.xpose.msra.mxu0 %v685
        %751 = vmatprep.subr.mxu0 %v688
        %752 = vmatpush1.xpose.msra.mxu0 %v687
        %753 = vmatprep.subr.mxu0 %v690
        %754 = vmatpush1.xpose.msra.mxu0 %v689
        %755 = vmatprep.subr.mxu0 %v692
        %756 = vmatpush1.xpose.msra.mxu0 %v691
        %757 = vmatprep.subr.mxu0 %v694
        %758 = vmatpush1.xpose.msra.mxu0 %v693
        %759 = vmatprep.subr.mxu0 %v696
        %760 = vmatpush1.xpose.msra.mxu0 %v695
        %761 = vmatprep.subr.mxu0 %v698
        %762 = vmatpush1.xpose.msra.mxu0 %v697
        %763 = vmatprep.subr.mxu0 %v700
        %764 = vmatpush1.xpose.msra.mxu0 %v699
        %765 = vmatprep.subr.mxu0 %v702
        %766 = vmatpush1.xpose.msra.mxu0 %v701
        %767 = vmatprep.subr.mxu0 %v704
        %768 = vmatpush1.xpose.msra.mxu0 %v703
        %769 = vmatprep.subr.mxu0 %v706
        %770 = vmatpush1.xpose.msra.mxu0 %v705
        %771 = vmatprep.subr.mxu0 %v708
        %772 = vmatpush1.xpose.msra.mxu0 %v707
        %773 = vmatprep.subr.mxu0 %v710
        %774 = vmatpush1.xpose.msra.mxu0 %v709
        %775 = vmatprep.subr.mxu0 %v712
        %776 = vmatpush1.xpose.msra.mxu0 %v711
        %777 = vmatprep.subr.mxu0 0.0
        %778 = vmatpush1.xpose.msra.mxu0 0.0
        %779 = vmatprep.subr.mxu0 0.0
        %780 = vmatpush1.xpose.msra.mxu0 0.0
        %781 = vmatprep.subr.mxu0 0.0
        %782 = vmatpush1.xpose.msra.mxu0 0.0
        %783 = vmatprep.subr.mxu0 0.0
        %784 = vmatpush1.xpose.msra.mxu0 0.0
        %785 = vmatprep.subr.mxu0 0.0
        %786 = vmatpush1.xpose.msra.mxu0 0.0
        %787 = vmatprep.subr.mxu0 0.0
        %788 = vmatpush1.xpose.msra.mxu0 0.0
        %789 = vmatprep.subr.mxu0 0.0
        %790 = vmatpush1.xpose.msra.mxu0 0.0
        %791 = vmatprep.subr.mxu0 0.0
        %792 = vmatpush1.xpose.msra.mxu0 0.0
        %793 = vmatprep.subr.mxu0 0.0
        %794 = vmatpush1.xpose.msra.mxu0 0.0
        %795 = vmatprep.subr.mxu0 0.0
        %796 = vmatpush1.xpose.msra.mxu0 0.0
        %797 = vmatprep.subr.mxu0 0.0
        %798 = vmatpush1.xpose.msra.mxu0 0.0
        %799 = vmatprep.subr.mxu0 0.0
        %800 = vmatpush1.xpose.msra.mxu0 0.0
        %801 = vmatprep.subr.mxu0 0.0
        %802 = vmatpush1.xpose.msra.mxu0 0.0
        %803 = vmatprep.subr.mxu0 0.0
        %804 = vmatpush1.xpose.msra.mxu0 0.0
        %805 = vmatprep.subr.mxu0 0.0
        %806 = vmatpush1.xpose.msra.mxu0 0.0
        %807 = vmatprep.subr.mxu0 0.0
        %808 = vmatpush1.xpose.msra.mxu0 0.0
        %809 = vmatprep.mubr.f32.mxu0 %v714
        %810 = vmatmul.mubr.f32.gmra.mrb[0].mxu0 %v713
        %v811 = vpop.f32.mrb[0].mxu0
        %v812 = vadd.f32 0.0, %v811
        %v813 = vpop.f32.mrb[0].mxu0
        %814 = vmatprep.mubr.f32.mxu0 %v716
        %815 = vmatmul.mubr.f32.gmra.mrb[0].mxu0 %v715
        %v816 = vpop.f32.mrb[0].mxu0
        %v817 = vadd.f32 0.0, %v816
        %v818 = vpop.f32.mrb[0].mxu0
        %819 = vmatprep.mubr.f32.mxu0 %v718
        %820 = vmatmul.mubr.f32.gmra.mrb[0].mxu0 %v717
        %v821 = vpop.f32.mrb[0].mxu0
        %v822 = vadd.f32 0.0, %v821
        %v823 = vpop.f32.mrb[0].mxu0
        %824 = vmatprep.mubr.f32.mxu0 %v720
        %825 = vmatmul.mubr.f32.gmra.mrb[0].mxu0 %v719
        %v826 = vpop.f32.mrb[0].mxu0
        %v827 = vadd.f32 0.0, %v826
        %v828 = vpop.f32.mrb[0].mxu0
        %829 = vmatprep.mubr.f32.mxu0 %v722
        %830 = vmatmul.mubr.f32.gmra.mrb[0].mxu0 %v721
        %v831 = vpop.f32.mrb[0].mxu0
        %v832 = vadd.f32 0.0, %v831
        %v833 = vpop.f32.mrb[0].mxu0
        %834 = vmatprep.mubr.f32.mxu0 %v724
        %835 = vmatmul.mubr.f32.gmra.mrb[0].mxu0 %v723
        %v836 = vpop.f32.mrb[0].mxu0
        %v837 = vadd.f32 0.0, %v836
        %v838 = vpop.f32.mrb[0].mxu0
        %839 = vmatprep.mubr.f32.mxu0 %v726
        %840 = vmatmul.mubr.f32.gmra.mrb[0].mxu0 %v725
        %v841 = vpop.f32.mrb[0].mxu0
        %v842 = vadd.f32 0.0, %v841
        %v843 = vpop.f32.mrb[0].mxu0
        %844 = vmatprep.mubr.f32.mxu0 %v728
        %845 = vmatmul.mubr.f32.gmra.mrb[0].mxu0 %v727
        %v846 = vpop.f32.mrb[0].mxu0
        %v847 = vadd.f32 0.0, %v846
        %v848 = vpop.f32.mrb[0].mxu0
        %849 = vmatprep.mubr.f32.mxu0 %v730
        %850 = vmatmul.mubr.f32.gmra.mrb[0].mxu0 %v729
        %v851 = vpop.f32.mrb[0].mxu0
        %v852 = vadd.f32 0.0, %v851
        %v853 = vpop.f32.mrb[0].mxu0
        %854 = vmatprep.mubr.f32.mxu0 %v732
        %855 = vmatmul.mubr.f32.gmra.mrb[0].mxu0 %v731
        %v856 = vpop.f32.mrb[0].mxu0
        %v857 = vadd.f32 0.0, %v856
        %v858 = vpop.f32.mrb[0].mxu0
        %859 = vmatprep.mubr.f32.mxu0 %v734
        %860 = vmatmul.mubr.f32.gmra.mrb[0].mxu0 %v733
        %v861 = vpop.f32.mrb[0].mxu0
        %v862 = vadd.f32 0.0, %v861
        %v863 = vpop.f32.mrb[0].mxu0
        %864 = vmatprep.mubr.f32.mxu0 %v736
        %865 = vmatmul.mubr.f32.gmra.mrb[0].mxu0 %v735
        %v866 = vpop.f32.mrb[0].mxu0
        %v867 = vadd.f32 0.0, %v866
        %v868 = vpop.f32.mrb[0].mxu0
        %869 = vmatprep.mubr.f32.mxu0 %v738
        %870 = vmatmul.mubr.f32.gmra.mrb[0].mxu0 %v737
        %v871 = vpop.f32.mrb[0].mxu0
        %v872 = vadd.f32 0.0, %v871
        %v873 = vpop.f32.mrb[0].mxu0
        %874 = vmatprep.mubr.f32.mxu0 %v740
        %875 = vmatmul.mubr.f32.gmra.mrb[0].mxu0 %v739
        %v876 = vpop.f32.mrb[0].mxu0
        %v877 = vadd.f32 0.0, %v876
        %v878 = vpop.f32.mrb[0].mxu0
        %879 = vmatprep.mubr.f32.mxu0 %v742
        %880 = vmatmul.mubr.f32.gmra.mrb[0].mxu0 %v741
        %v881 = vpop.f32.mrb[0].mxu0
        %v882 = vadd.f32 0.0, %v881
        %v883 = vpop.f32.mrb[0].mxu0
        %884 = vmatprep.mubr.f32.mxu0 %v744
        %885 = vmatmul.mubr.f32.gmra.mrb[0].mxu0 %v743
        %v886 = vpop.f32.mrb[0].mxu0
        %v887 = vadd.f32 0.0, %v886
        %v888 = vpop.f32.mrb[0].mxu0
        %889 = vdwg.mxu0
        %p890 = scmp.eq.s32.totalorder %s35, 0
        // Predicated region
        $region65: #{tpu_custom_call.1} parent=47 // pred_check
          %p891 = pneg %p890
        $region66: #{tpu_custom_call.1} parent=47 // pred_check_branch
          %893 = sbr.rel (%p891) target = $region68
        $region67: #{tpu_custom_call.1} parent=47 // pred_region
          %894 = vst [vmem:[%s470] sm:$0xff] %v812
          %895 = vst [vmem:[%s470 + $0x8] sm:$0xff] %v817
          %896 = vst [vmem:[%s470 + $0x10] sm:$0xff] %v822
          %897 = vst [vmem:[%s470 + $0x18] sm:$0xff] %v827
          %898 = vst [vmem:[%s470 + $0x20] sm:$0xff] %v832
          %899 = vst [vmem:[%s470 + $0x28] sm:$0xff] %v837
          %900 = vst [vmem:[%s470 + $0x30] sm:$0xff] %v842
          %901 = vst [vmem:[%s470 + $0x38] sm:$0xff] %v847
          %902 = vst [vmem:[%s470 + $0x40] sm:$0xff] %v852
          %903 = vst [vmem:[%s470 + $0x48] sm:$0xff] %v857
          %904 = vst [vmem:[%s470 + $0x50] sm:$0xff] %v862
          %905 = vst [vmem:[%s470 + $0x58] sm:$0xff] %v867
          %906 = vst [vmem:[%s470 + $0x60] sm:$0xff] %v872
          %907 = vst [vmem:[%s470 + $0x68] sm:$0xff] %v877
          %908 = vst [vmem:[%s470 + $0x70] sm:$0xff] %v882
          %909 = vst [vmem:[%s470 + $0x78] sm:$0xff] %v887
        $region68: #{tpu_custom_call.1} parent=47 // pred_fallthru
          _
        %p910 = scmp.gt.s32.totalorder %s35, 0
        // Predicated region
        $region69: #{tpu_custom_call.1} parent=47 // pred_check
          %p911 = pneg %p910
        $region70: #{tpu_custom_call.1} parent=47 // pred_check_branch
          %913 = sbr.rel (%p911) target = $region72
        $region71: #{tpu_custom_call.1} parent=47 // pred_region
          %v914 = vld [vmem:[%s470] sm:$0xff]
          %v915 = vld [vmem:[%s470 + $0x8] sm:$0xff]
          %v916 = vld [vmem:[%s470 + $0x10] sm:$0xff]
          %v917 = vld [vmem:[%s470 + $0x18] sm:$0xff]
          %v918 = vld [vmem:[%s470 + $0x20] sm:$0xff]
          %v919 = vld [vmem:[%s470 + $0x28] sm:$0xff]
          %v920 = vld [vmem:[%s470 + $0x30] sm:$0xff]
          %v921 = vld [vmem:[%s470 + $0x38] sm:$0xff]
          %v922 = vld [vmem:[%s470 + $0x40] sm:$0xff]
          %v923 = vld [vmem:[%s470 + $0x48] sm:$0xff]
          %v924 = vld [vmem:[%s470 + $0x50] sm:$0xff]
          %v925 = vld [vmem:[%s470 + $0x58] sm:$0xff]
          %v926 = vld [vmem:[%s470 + $0x60] sm:$0xff]
          %v927 = vld [vmem:[%s470 + $0x68] sm:$0xff]
          %v928 = vld [vmem:[%s470 + $0x70] sm:$0xff]
          %v929 = vld [vmem:[%s470 + $0x78] sm:$0xff]
          %v930 = vadd.f32 %v914, %v812
          %v931 = vadd.f32 %v915, %v817
          %v932 = vadd.f32 %v916, %v822
          %v933 = vadd.f32 %v917, %v827
          %v934 = vadd.f32 %v918, %v832
          %v935 = vadd.f32 %v919, %v837
          %v936 = vadd.f32 %v920, %v842
          %v937 = vadd.f32 %v921, %v847
          %v938 = vadd.f32 %v922, %v852
          %v939 = vadd.f32 %v923, %v857
          %v940 = vadd.f32 %v924, %v862
          %v941 = vadd.f32 %v925, %v867
          %v942 = vadd.f32 %v926, %v872
          %v943 = vadd.f32 %v927, %v877
          %v944 = vadd.f32 %v928, %v882
          %v945 = vadd.f32 %v929, %v887
          %946 = vst [vmem:[%s470] sm:$0xff] %v930
          %947 = vst [vmem:[%s470 + $0x8] sm:$0xff] %v931
          %948 = vst [vmem:[%s470 + $0x10] sm:$0xff] %v932
          %949 = vst [vmem:[%s470 + $0x18] sm:$0xff] %v933
          %950 = vst [vmem:[%s470 + $0x20] sm:$0xff] %v934
          %951 = vst [vmem:[%s470 + $0x28] sm:$0xff] %v935
          %952 = vst [vmem:[%s470 + $0x30] sm:$0xff] %v936
          %953 = vst [vmem:[%s470 + $0x38] sm:$0xff] %v937
          %954 = vst [vmem:[%s470 + $0x40] sm:$0xff] %v938
          %955 = vst [vmem:[%s470 + $0x48] sm:$0xff] %v939
          %956 = vst [vmem:[%s470 + $0x50] sm:$0xff] %v940
          %957 = vst [vmem:[%s470 + $0x58] sm:$0xff] %v941
          %958 = vst [vmem:[%s470 + $0x60] sm:$0xff] %v942
          %959 = vst [vmem:[%s470 + $0x68] sm:$0xff] %v943
          %960 = vst [vmem:[%s470 + $0x70] sm:$0xff] %v944
          %961 = vst [vmem:[%s470 + $0x78] sm:$0xff] %v945
        $region72: #{tpu_custom_call.1} parent=47 // pred_fallthru
          _
        // Predicated region
        $region73: #{tpu_custom_call.1} parent=47 // pred_check
          %p962 = pneg %p890
        $region74: #{tpu_custom_call.1} parent=47 // pred_check_branch
          %964 = sbr.rel (%p962) target = $region76
        $region75: #{tpu_custom_call.1} parent=47 // pred_region
          %v965 = vld [vmem:[%s481] sm:$0x1]
          %v966 = vld [vmem:[%s484] sm:$0x1]
          %v967 = vmul.f32 %v966, 1.442695
          %v968 = vpow.pop %v967
          %v969 = vld [vmem:[%s487] sm:$0x1]
          %v970 = vmul.f32 %v968, %v969
          %v971 = vadd.f32 %v965, %v970
          %v972 = vld [vmem:[%s470] sm:$0xff]
          %v973 = vld [vmem:[%s470 + $0x8] sm:$0xff]
          %v974 = vld [vmem:[%s470 + $0x10] sm:$0xff]
          %v975 = vld [vmem:[%s470 + $0x18] sm:$0xff]
          %v976 = vld [vmem:[%s470 + $0x20] sm:$0xff]
          %v977 = vld [vmem:[%s470 + $0x28] sm:$0xff]
          %v978 = vld [vmem:[%s470 + $0x30] sm:$0xff]
          %v979 = vld [vmem:[%s470 + $0x38] sm:$0xff]
          %v980 = vld [vmem:[%s470 + $0x40] sm:$0xff]
          %v981 = vld [vmem:[%s470 + $0x48] sm:$0xff]
          %v982 = vld [vmem:[%s470 + $0x50] sm:$0xff]
          %v983 = vld [vmem:[%s470 + $0x58] sm:$0xff]
          %v984 = vld [vmem:[%s470 + $0x60] sm:$0xff]
          %v985 = vld [vmem:[%s470 + $0x68] sm:$0xff]
          %v986 = vld [vmem:[%s470 + $0x70] sm:$0xff]
          %v987 = vld [vmem:[%s470 + $0x78] sm:$0xff]
          %v989 = vlaneseq
          %v990 = vshrl.u32 %v989, 7
          %v991 = vsub.s32 0, %v990
          %v992 = vrot.slane %v971, %v991
          %v994 = vadd.f32 %v972, %v992
          %v995 = vadd.f32 %v973, %v992
          %v996 = vadd.f32 %v974, %v992
          %v997 = vadd.f32 %v975, %v992
          %v998 = vadd.f32 %v976, %v992
          %v999 = vadd.f32 %v977, %v992
          %v1000 = vadd.f32 %v978, %v992
          %v1001 = vadd.f32 %v979, %v992
          %v1002 = vadd.f32 %v980, %v992
          %v1003 = vadd.f32 %v981, %v992
          %v1004 = vadd.f32 %v982, %v992
          %v1005 = vadd.f32 %v983, %v992
          %v1006 = vadd.f32 %v984, %v992
          %v1007 = vadd.f32 %v985, %v992
          %v1008 = vadd.f32 %v986, %v992
          %v1009 = vadd.f32 %v987, %v992
          %1010 = vst [vmem:[%s470] sm:$0xff] %v994
          %1011 = vst [vmem:[%s470 + $0x8] sm:$0xff] %v995
          %1012 = vst [vmem:[%s470 + $0x10] sm:$0xff] %v996
          %1013 = vst [vmem:[%s470 + $0x18] sm:$0xff] %v997
          %1014 = vst [vmem:[%s470 + $0x20] sm:$0xff] %v998
          %1015 = vst [vmem:[%s470 + $0x28] sm:$0xff] %v999
          %1016 = vst [vmem:[%s470 + $0x30] sm:$0xff] %v1000
          %1017 = vst [vmem:[%s470 + $0x38] sm:$0xff] %v1001
          %1018 = vst [vmem:[%s470 + $0x40] sm:$0xff] %v1002
          %1019 = vst [vmem:[%s470 + $0x48] sm:$0xff] %v1003
          %1020 = vst [vmem:[%s470 + $0x50] sm:$0xff] %v1004
          %1021 = vst [vmem:[%s470 + $0x58] sm:$0xff] %v1005
          %1022 = vst [vmem:[%s470 + $0x60] sm:$0xff] %v1006
          %1023 = vst [vmem:[%s470 + $0x68] sm:$0xff] %v1007
          %1024 = vst [vmem:[%s470 + $0x70] sm:$0xff] %v1008
          %1025 = vst [vmem:[%s470 + $0x78] sm:$0xff] %v1009
        $region76: #{tpu_custom_call.1} parent=47 // pred_fallthru
          _
        %s1026 = sand.u32 %s247, 1
        %s1027 = scalar_lea.sflag [#allocation4], %s1026
        %s1028 = sand.u32 %s247, 1
        %s1029 = smul.addr %s1028, 128
        %s1030 = scalar_lea.vmem [#allocation10], %s1029
        // Predicated region
        $region77: #{tpu_custom_call.1} parent=47 // pred_check
          %p1031 = pneg %p257
        $region78: #{tpu_custom_call.1} parent=47 // pred_check_branch
          %1033 = sbr.rel (%p1031) target = $region80
        $region79: #{tpu_custom_call.1} parent=47 // pred_region
          %s1034 = smul.u32 16, %s33
          %s1036 = ssub.s32 2048, 2048
          %1037 = vsyncadd %s1027, %s1036
          %s1038 = smul.addr %s1034, 3
          %s1039 = sadd.s32 %s34, %s1038
          %s1040 = smul.addr %s1039, 128
          %s1041 = scalar_lea.hbm %s7, %s1040
          %s1042 = sshll.u32 %s1030, 4
          %s1043 = int_to_ptr.vmem [resolvable:$true] %s1042
          %1048 = dma.vmem_to_hbm [thread:$0]  %s1043, 2048, %s1041, %s1027, 128, 384, 8
        $region80: #{tpu_custom_call.1} parent=47 // pred_fallthru
          _
      $region48: #{tpu_custom_call.1} parent=5 // pred_fallthru
        _
      %p1049 = scmp.le.s32.totalorder 2, %s23
      // Predicated region
      $region81: #{tpu_custom_call.1} parent=5 // pred_check
        %p1050 = pneg %p1049
      $region82: #{tpu_custom_call.1} parent=5 // pred_check_branch
        %1052 = sbr.rel (%p1050) target = $region84
      $region83: #{tpu_custom_call.1} parent=5 // pred_region
        %s1053 = ssub.s32 %s23, 2
        // Predicated region
        $region85: #{tpu_custom_call.1} parent=83 // pred_check
          %p1054 = pneg %p263
        $region86: #{tpu_custom_call.1} parent=83 // pred_check_branch
          %1056 = sbr.rel (%p1054) target = $region88
        $region87: #{tpu_custom_call.1} parent=83 // pred_region
          %s1057 = sand.u32 %s248, 1
          %s1058 = scalar_lea.sflag [#allocation4], %s1057
          %s1059 = sand.u32 %s248, 1
          %s1060 = smul.addr %s1059, 128
          %s1061 = scalar_lea.vmem [#allocation10], %s1060
          %1062 = dma.done %s1058, 2048
        $region88: #{tpu_custom_call.1} parent=83 // pred_fallthru
          _
      $region84: #{tpu_custom_call.1} parent=5 // pred_fallthru
        _
    $region6: #{tpu_custom_call.1} parent=1 // loop_footer
      %s27 = sadd.s32 1, %s23
    $region7: #{tpu_custom_call.1} parent=1 // loop_footer_branch
      %22 = sbr.rel target = $region3
    $region8: #{tpu_custom_call.1} parent=1 // loop_exit
      _
    %1063 = vsyncpa [#allocation3], 1
    %s1064 = scalar_lea.sflag [#allocation3], 1
    %1065 = vsyncpa %s1064, 1
    %1066 = vsyncpa [#allocation6], 1
    %s1067 = scalar_lea.sflag [#allocation6], 1
    %1068 = vsyncpa %s1067, 1
    %1069 = vsyncpa [#allocation9], 1
    %s1070 = scalar_lea.sflag [#allocation9], 1
    %1071 = vsyncpa %s1070, 1
    %1072 = vsyncpa [#allocation4], 1
    %s1073 = scalar_lea.sflag [#allocation4], 1
    %1074 = vsyncpa %s1073, 1

</llo_original>
